<compile_context>
chip_gen: v5e
topology: v5e:2x2
jax: 0.10.0
libtpu: 0.0.40
codegen_flags: <defaults>
</compile_context>

<pallas_src>
import jax
import jax.numpy as jnp
from jax.experimental import pallas as pl
from jax.experimental.pallas import tpu as pltpu  # noqa: F401  (TPU backend)


def mlp_kernel(x_ref, p_ref, o_ref):
    # x_ref: (1, BP)        batch on the lane axis (lane-dense), zero-padded
    # p_ref: (n_hidden, 4)  columns = [w1, b1, w2, b2 (row 0 only)]
    # o_ref: (1, BP)        lane-dense output row
    x_row = x_ref[...]                      # (1, BP)
    w1c = p_ref[:, 0:1]                     # (H, 1)
    b1c = p_ref[:, 1:2]                     # (H, 1)
    w2c = p_ref[:, 2:3]                     # (H, 1)
    b2v = p_ref[0:1, 3:4]                   # (1, 1)

    # Layer 1 (K=1 "matmul" == outer product): pure VPU broadcast MAD + relu.
    h = jnp.maximum(w1c * x_row + b1c, 0.0)             # (H, BP)

    # Layer 2 (N=1 "matmul"): elementwise mul + cross-sublane reduction (XLU).
    out = jnp.sum(h * w2c, axis=0, keepdims=True) + b2v  # (1, BP)
    o_ref[...] = out.astype(o_ref.dtype)


def net_forward(x, w1, b1, w2, b2):
    """relu(x @ w1.T + b1) @ w2.T + b2  with torch Linear parameter shapes:
    w1: (n_hidden, n_features), b1: (n_hidden,), w2: (n_output, n_hidden),
    b2: (n_output,). Specialized for n_features == n_output == 1 (the shapes
    this module is actually used with).
    """
    batch, n_features = x.shape
    n_hidden = w1.shape[0]
    n_output = w2.shape[0]
    assert n_features == 1 and n_output == 1, "kernel specialized for 1->H->1 MLP"

    # Pad batch up to the 128-lane width so loads/stores are full, unmasked vregs.
    BP = ((batch + 127) // 128) * 128

    # Lane-dense input: (batch, 1) -> (1, BP) with zero padding.
    x_row = jnp.pad(x.reshape(1, batch), ((0, 0), (0, BP - batch)))

    # Pack all parameters into a single small VMEM tile -> one parameter DMA.
    params = jnp.stack(
        [w1[:, 0], b1, w2[0, :], jnp.broadcast_to(b2, (n_hidden,))], axis=1
    )  # (n_hidden, 4)

    out_row = pl.pallas_call(
        mlp_kernel,
        out_shape=jax.ShapeDtypeStruct((1, BP), jnp.float32),
        in_specs=[
            pl.BlockSpec((1, BP), lambda: (0, 0)),
            pl.BlockSpec((n_hidden, 4), lambda: (0, 0)),
        ],
        out_specs=pl.BlockSpec((1, BP), lambda: (0, 0)),
    )(x_row, params)

    # Drop the lane padding and restore the (batch, n_output) layout.
    return out_row[0, :batch].reshape(batch, n_output)


def reference_forward(x, w1, b1, w2, b2):
    h = jnp.maximum(x @ w1.T + b1, 0.0)
    return h @ w2.T + b2


if __name__ == "__main__":
    # Shapes implied by the module's usage: x = linspace(-1, 1, 100)[:, None]
    # -> n_features = 1, n_output = 1; pick n_hidden = 32.
    n_features, n_hidden, n_output = 1, 32, 1
    batch = 100

    key = jax.random.PRNGKey(0)
    k1, k2, k3, k4 = jax.random.split(key, 4)

    # Deterministic synthetic parameters (PyTorch-Linear-like uniform init),
    # stored with torch Linear shapes.
    bound1 = 1.0 / (n_features ** 0.5)
    w1 = jax.random.uniform(k1, (n_hidden, n_features), jnp.float32, -bound1, bound1)
    b1 = jax.random.uniform(k2, (n_hidden,), jnp.float32, -bound1, bound1)
    bound2 = 1.0 / (n_hidden ** 0.5)
    w2 = jax.random.uniform(k3, (n_output, n_hidden), jnp.float32, -bound2, bound2)
    b2 = jax.random.uniform(k4, (n_output,), jnp.float32, -bound2, bound2)

    # Input matching the torch script: linspace(-1, 1, 100) unsqueezed to (100, 1).
    x = jnp.linspace(-1.0, 1.0, batch, dtype=jnp.float32).reshape(batch, 1)

    out = net_forward(x, w1, b1, w2, b2)
    jax.block_until_ready(out)

    ref = reference_forward(x, w1, b1, w2, b2)
    assert out.shape == (batch, n_output)
    assert jnp.allclose(out, ref, atol=1e-5, rtol=1e-5)

    print("KERNEL_OK")
</pallas_src>

<mosaic_0001>
module attributes {stable_mosaic.version = 11 : i64} {
  func.func @mlp_kernel(%arg0: memref<1x128xf32, #tpu.memory_space<vmem>>, %arg1: memref<32x4xf32, #tpu.memory_space<vmem>>, %arg2: memref<1x128xf32, #tpu.memory_space<vmem>>) attributes {dimension_semantics = [], scalar_prefetch = 0 : i64, scratch_operands = 0 : i64, tpu.core_type = #tpu.core_type<tc>} {
    %c0 = arith.constant 0 : index
    %c0_0 = arith.constant 0 : index
    %0 = vector.load %arg0[%c0, %c0_0] : memref<1x128xf32, #tpu.memory_space<vmem>>, vector<1x128xf32>
    %c0_1 = arith.constant 0 : index
    %c0_2 = arith.constant 0 : index
    %1 = vector.load %arg1[%c0_1, %c0_2] : memref<32x4xf32, #tpu.memory_space<vmem>>, vector<32x1xf32>
    %c0_3 = arith.constant 0 : index
    %c1 = arith.constant 1 : index
    %2 = vector.load %arg1[%c0_3, %c1] : memref<32x4xf32, #tpu.memory_space<vmem>>, vector<32x1xf32>
    %c0_4 = arith.constant 0 : index
    %c2 = arith.constant 2 : index
    %3 = vector.load %arg1[%c0_4, %c2] : memref<32x4xf32, #tpu.memory_space<vmem>>, vector<32x1xf32>
    %c0_5 = arith.constant 0 : index
    %c3 = arith.constant 3 : index
    %4 = vector.load %arg1[%c0_5, %c3] : memref<32x4xf32, #tpu.memory_space<vmem>>, vector<1x1xf32>
    %5 = vector.broadcast %1 : vector<32x1xf32> to vector<32x128xf32>
    %6 = vector.broadcast %0 : vector<1x128xf32> to vector<32x128xf32>
    %7 = arith.mulf %5, %6 : vector<32x128xf32>
    %8 = vector.broadcast %2 : vector<32x1xf32> to vector<32x128xf32>
    %9 = arith.addf %7, %8 : vector<32x128xf32>
    %cst = arith.constant 0.000000e+00 : f32
    %10 = vector.broadcast %cst : f32 to vector<32x128xf32>
    %11 = arith.maximumf %9, %10 : vector<32x128xf32>
    %12 = vector.broadcast %3 : vector<32x1xf32> to vector<32x128xf32>
    %13 = arith.mulf %11, %12 : vector<32x128xf32>
    %cst_6 = arith.constant dense<0.000000e+00> : vector<128xf32>
    %14 = vector.multi_reduction <add>, %13, %cst_6 [0] : vector<32x128xf32> to vector<128xf32>
    %15 = vector.shape_cast %14 : vector<128xf32> to vector<1x128xf32>
    %16 = vector.broadcast %4 : vector<1x1xf32> to vector<1x128xf32>
    %17 = arith.addf %15, %16 : vector<1x128xf32>
    %c0_7 = arith.constant 0 : index
    %c0_8 = arith.constant 0 : index
    %18 = vector.load %arg2[%c0_7, %c0_8] : memref<1x128xf32, #tpu.memory_space<vmem>>, vector<1x128xf32>
    tpu.vector_store %arg2[%c0_7, %c0_8], %17 {strides = array<i32>} : memref<1x128xf32, #tpu.memory_space<vmem>>, vector<1x128xf32>,
    return
  }
}

</mosaic_0001>

<llo_original>
// kernel: tpu_custom_call.1
$region0: #{tpu_custom_call.1}
  #allocation0 [shape = 'u32[]', space=smem, size = 0x4, offset = 0x4, fixed_abs, tag = 'smem constant byte address 0x4 - core index']
  #allocation1 [shape = 'u32[72,128]{1,0:T(1,128)}', space=vmem, size = 0x9000, scoped, tag = 'internal scratch']
  %s0 = inlined_call_operand.vmem [shape: f32[1,128], index: 0, kind: input, shape index: {}]
  %s1 = inlined_call_operand.vmem [shape: f32[32,4], index: 1, kind: input, shape index: {}]
  %s2 = inlined_call_operand.hbm [shape: f32[1,128], index: 2, kind: output, shape index: {}]
  %s3 = sld [smem:[#allocation0]]
  $region18: #{tpu_custom_call.1} parent=0
    _
  %s5 = ssub.s32 1, %s3
  %s6 = scalar_select 0, %s5, %s3
  $region1: #{tpu_custom_call.1} parent=0
    #allocation2 [shape = 'u8[512]{0}', space=vmem, size = 0x400, scoped, tag = 'output window, operand 0, single buffered']
    #allocation3 [shape = 's32[1]{0}', space=sflag, size = 0x4, scoped, tag = 'scoped memory for tpu_custom_call.1']
    %7 = vsyncpa [#allocation3], 0
    // Predicated region
    $region2: #{tpu_custom_call.1} parent=1 // pred_check
      _
    $region3: #{tpu_custom_call.1} parent=1 // pred_check_branch
      %9 = sbr.rel (0) target = $region5
    $region4: #{tpu_custom_call.1} parent=1 // pred_region
      _
    $region5: #{tpu_custom_call.1} parent=1 // pred_fallthru
      _
    // Predicated region
    $region6: #{tpu_custom_call.1} parent=1 // pred_check
      _
    $region7: #{tpu_custom_call.1} parent=1 // pred_check_branch
      %11 = sbr.rel (0) target = $region9
    $region8: #{tpu_custom_call.1} parent=1 // pred_region
      _
    $region9: #{tpu_custom_call.1} parent=1 // pred_fallthru
      _
    %v12 = vld [vmem:[%s0] sm:$0x1]
    %v13 = vld [vmem:[%s1] sm:$0xff]
    %v14 = vld [vmem:[%s1 + $0x8] sm:$0xff]
    %v15 = vld [vmem:[%s1 + $0x10] sm:$0xff]
    %v16 = vld [vmem:[%s1 + $0x18] sm:$0xff]
    %v17 = vld [vmem:[%s1] sm:$0x1]
    %19 = vset.pattern.permute.xlu0 0
    %20 = vperm.xlu0 %19, %v13
    %v21 = vpop.permute.xlu0 %20
    %24 = vset.pattern.permute.xlu0 0
    %25 = vperm.xlu0 %24, %v14
    %v26 = vpop.permute.xlu0 %25
    %29 = vset.pattern.permute.xlu0 0
    %30 = vperm.xlu0 %29, %v15
    %v31 = vpop.permute.xlu0 %30
    %34 = vset.pattern.permute.xlu0 0
    %35 = vperm.xlu0 %34, %v16
    %v36 = vpop.permute.xlu0 %35
    %v39 = vperm.slane %v12, 0
    %v41 = vmul.f32 %v21, %v39
    %v42 = vmul.f32 %v26, %v39
    %v43 = vmul.f32 %v31, %v39
    %v44 = vmul.f32 %v36, %v39
    %45 = vset.pattern.permute.xlu0 1
    %46 = vperm.xlu0 %45, %v13
    %v47 = vpop.permute.xlu0 %46
    %49 = vset.pattern.permute.xlu0 1
    %50 = vperm.xlu0 %49, %v14
    %v51 = vpop.permute.xlu0 %50
    %53 = vset.pattern.permute.xlu0 1
    %54 = vperm.xlu0 %53, %v15
    %v55 = vpop.permute.xlu0 %54
    %57 = vset.pattern.permute.xlu0 1
    %58 = vperm.xlu0 %57, %v16
    %v59 = vpop.permute.xlu0 %58
    %v61 = vadd.f32 %v41, %v47
    %v62 = vadd.f32 %v42, %v51
    %v63 = vadd.f32 %v43, %v55
    %v64 = vadd.f32 %v44, %v59
    %v65 = vmax.f32 %v61, 0.0
    %v66 = vmax.f32 %v62, 0.0
    %v67 = vmax.f32 %v63, 0.0
    %v68 = vmax.f32 %v64, 0.0
    %69 = vset.pattern.permute.xlu0 2
    %70 = vperm.xlu0 %69, %v13
    %v71 = vpop.permute.xlu0 %70
    %73 = vset.pattern.permute.xlu0 2
    %74 = vperm.xlu0 %73, %v14
    %v75 = vpop.permute.xlu0 %74
    %77 = vset.pattern.permute.xlu0 2
    %78 = vperm.xlu0 %77, %v15
    %v79 = vpop.permute.xlu0 %78
    %81 = vset.pattern.permute.xlu0 2
    %82 = vperm.xlu0 %81, %v16
    %v83 = vpop.permute.xlu0 %82
    %v85 = vmul.f32 %v65, %v71
    %v86 = vmul.f32 %v66, %v75
    %v87 = vmul.f32 %v67, %v79
    %v88 = vmul.f32 %v68, %v83
    %v89 = vadd.f32 %v85, %v86
    %v90 = vadd.f32 %v89, %v87
    %v91 = vadd.f32 %v90, %v88
    %v92 = vrot.slane %v91, 4
    %v93 = vadd.f32 %v91, %v92
    %v94 = vrot.slane %v93, 2
    %v95 = vadd.f32 %v93, %v94
    %v96 = vrot.slane %v95, 1
    %v97 = vadd.f32 %v95, %v96
    %99 = vset.pattern.permute.xlu0 3
    %100 = vperm.xlu0 %99, %v17
    %v101 = vpop.permute.xlu0 %100
    %v103 = vadd.f32 %v97, %v101
    %104 = vst [vmem:[#allocation2] sm:$0x1] %v103
    // Predicated region
    $region10: #{tpu_custom_call.1} parent=1 // pred_check
      _
    $region11: #{tpu_custom_call.1} parent=1 // pred_check_branch
      %106 = sbr.rel (0) target = $region13
    $region12: #{tpu_custom_call.1} parent=1 // pred_region
      %108 = vsyncadd [#allocation3], 0
      %s110 = sshll.u32 [#allocation2], 4
      %s111 = int_to_ptr.vmem [resolvable:$true] %s110
      %s112 = sshll.u32 %s2, 4
      %s113 = int_to_ptr.hbm [resolvable:$true] %s112
      %115 = dma.vmem_to_hbm [thread:$0]  %s111, 16, %s113, [#allocation3]
    $region13: #{tpu_custom_call.1} parent=1 // pred_fallthru
      _
    // Predicated region
    $region14: #{tpu_custom_call.1} parent=1 // pred_check
      _
    $region15: #{tpu_custom_call.1} parent=1 // pred_check_branch
      %117 = sbr.rel (0) target = $region17
    $region16: #{tpu_custom_call.1} parent=1 // pred_region
      %119 = dma.done [#allocation3], 16
    $region17: #{tpu_custom_call.1} parent=1 // pred_fallthru
      _
    %120 = vsyncpa [#allocation3], 1

</llo_original>
